<compile_context>
chip_gen: v5e
topology: v5e:2x2
jax: 0.10.0
libtpu: 0.0.40
codegen_flags: <defaults>
</compile_context>

<pallas_src>
import functools

import jax
import jax.numpy as jnp
from jax.experimental import pallas as pl
from jax.experimental.pallas import tpu as pltpu


def mlp_kernel(x_ref, w1_ref, b1_ref, w2_ref, b2_ref, w3_ref, b3_ref, o_ref):
    # fc1 + relu  (bf16 MXU inputs, f32 accumulation)
    h1 = jnp.dot(x_ref[...], w1_ref[...], preferred_element_type=jnp.float32)
    h1 = jnp.maximum(h1 + b1_ref[...], 0.0)
    # fc2 + relu
    h2 = jnp.dot(h1.astype(jnp.bfloat16), w2_ref[...],
                 preferred_element_type=jnp.float32)
    h2 = jnp.maximum(h2 + b2_ref[...], 0.0)
    # fc3 + sigmoid
    h3 = jnp.dot(h2.astype(jnp.bfloat16), w3_ref[...],
                 preferred_element_type=jnp.float32)
    h3 = h3 + b3_ref[...]
    o_ref[...] = jax.nn.sigmoid(h3).astype(o_ref.dtype)


def _round_up(n, m):
    return ((n + m - 1) // m) * m


def prepare_params(params):
    """One-time conversion from PyTorch convention: pre-transpose weights to
    (in, out) and cast to bf16 for the MXU; keep biases f32 as (1, out)."""
    return {
        "w1": params["w1"].T.astype(jnp.bfloat16),   # (56, 24)
        "b1": params["b1"].reshape(1, -1).astype(jnp.float32),
        "w2": params["w2"].T.astype(jnp.bfloat16),   # (24, 12)
        "b2": params["b2"].reshape(1, -1).astype(jnp.float32),
        "w3": params["w3"].T.astype(jnp.bfloat16),   # (12, 6)
        "b3": params["b3"].reshape(1, -1).astype(jnp.float32),
    }


@functools.partial(jax.jit, static_argnames=("tile_b",))
def net_forward(x, prep, tile_b=1024):
    """x: (B, 56) float32. prep: output of prepare_params."""
    B, F = x.shape
    assert F == 56, F

    # Tile the batch; keep the tile a multiple of 8 (sublane) and no larger
    # than the (rounded-up) batch.  Pad the batch so the grid never reads or
    # writes out-of-range rows; the pad is sliced off at the end.
    tile_b = min(tile_b, _round_up(B, 8))
    b_pad = _round_up(B, tile_b)
    if b_pad != B:
        x = jnp.pad(x, ((0, b_pad - B), (0, 0)))
    x = x.astype(jnp.bfloat16)

    grid = (b_pad // tile_b,)

    def resident(arr):
        # Full-array block with a constant block index: Pallas fetches it once
        # and keeps it resident in VMEM across all batch tiles.
        return pl.BlockSpec(arr.shape, lambda i: (0, 0))

    out = pl.pallas_call(
        mlp_kernel,
        out_shape=jax.ShapeDtypeStruct((b_pad, 6), jnp.float32),
        grid=grid,
        in_specs=[
            pl.BlockSpec((tile_b, 56), lambda i: (i, 0)),   # x: streamed
            resident(prep["w1"]),
            resident(prep["b1"]),
            resident(prep["w2"]),
            resident(prep["b2"]),
            resident(prep["w3"]),
            resident(prep["b3"]),
        ],
        out_specs=pl.BlockSpec((tile_b, 6), lambda i: (i, 0)),
        compiler_params=pltpu.CompilerParams(
            dimension_semantics=("parallel",)),   # dual-TC sharding on v7x
    )(x, prep["w1"], prep["b1"], prep["w2"], prep["b2"],
      prep["w3"], prep["b3"])

    return out[:B]


def init_params(key):
    """Deterministic init mimicking nn.Linear default: U(-1/sqrt(fan_in), ...)."""
    def linear(key, out_f, in_f):
        kw, kb = jax.random.split(key)
        bound = 1.0 / jnp.sqrt(in_f)
        w = jax.random.uniform(kw, (out_f, in_f), jnp.float32, -bound, bound)
        b = jax.random.uniform(kb, (out_f,), jnp.float32, -bound, bound)
        return w, b

    k1, k2, k3 = jax.random.split(key, 3)
    w1, b1 = linear(k1, 24, 56)
    w2, b2 = linear(k2, 12, 24)
    w3, b3 = linear(k3, 6, 12)
    return {"w1": w1, "b1": b1, "w2": w2, "b2": b2, "w3": w3, "b3": b3}


def reference_forward(x, params):
    h = jnp.maximum(x @ params["w1"].T + params["b1"], 0.0)
    h = jnp.maximum(h @ params["w2"].T + params["b2"], 0.0)
    h = h @ params["w3"].T + params["b3"]
    return jax.nn.sigmoid(h)


if __name__ == "__main__":
    key = jax.random.PRNGKey(0)
    kx, kp = jax.random.split(key)
    B = 8
    x = jax.random.normal(kx, (B, 56), jnp.float32)
    params = init_params(kp)
    prep = prepare_params(params)   # one-time transpose/cast, hoisted

    out = net_forward(x, prep)
    out = jax.block_until_ready(out)

    ref = reference_forward(x, params)  # f32 reference
    assert out.shape == (B, 6), out.shape
    # bf16 input/weight streaming -> relaxed tolerance vs the f32 reference.
    assert jnp.allclose(out, ref, atol=2e-2, rtol=2e-2), "mismatch vs reference"
    print("KERNEL_OK")
</pallas_src>

<mosaic_0001>
module attributes {stable_mosaic.version = 11 : i64} {
  func.func @mlp_kernel(%arg0: i32, %arg1: memref<8x56xbf16, #tpu.memory_space<vmem>>, %arg2: memref<56x24xbf16, #tpu.memory_space<vmem>>, %arg3: memref<1x24xf32, #tpu.memory_space<vmem>>, %arg4: memref<24x12xbf16, #tpu.memory_space<vmem>>, %arg5: memref<1x12xf32, #tpu.memory_space<vmem>>, %arg6: memref<12x6xbf16, #tpu.memory_space<vmem>>, %arg7: memref<1x6xf32, #tpu.memory_space<vmem>>, %arg8: memref<8x6xf32, #tpu.memory_space<vmem>>) attributes {dimension_semantics = [#tpu.dimension_semantics<parallel>], iteration_bounds = array<i64: 1>, scalar_prefetch = 0 : i64, scratch_operands = 0 : i64, tpu.core_type = #tpu.core_type<tc>, window_params = [{transform_indices = @transform_0, window_bounds = array<i64: 8, 56>}, {pipeline_mode = #tpu.pipeline_mode<synchronous>, transform_indices = @transform_1, window_bounds = array<i64: 56, 24>}, {pipeline_mode = #tpu.pipeline_mode<synchronous>, transform_indices = @transform_2, window_bounds = array<i64: 1, 24>}, {pipeline_mode = #tpu.pipeline_mode<synchronous>, transform_indices = @transform_3, window_bounds = array<i64: 24, 12>}, {pipeline_mode = #tpu.pipeline_mode<synchronous>, transform_indices = @transform_4, window_bounds = array<i64: 1, 12>}, {pipeline_mode = #tpu.pipeline_mode<synchronous>, transform_indices = @transform_5, window_bounds = array<i64: 12, 6>}, {pipeline_mode = #tpu.pipeline_mode<synchronous>, transform_indices = @transform_6, window_bounds = array<i64: 1, 6>}, {transform_indices = @transform_7, window_bounds = array<i64: 8, 6>}]} {
    %c0 = arith.constant 0 : index
    %c0_0 = arith.constant 0 : index
    %0 = vector.load %arg1[%c0, %c0_0] : memref<8x56xbf16, #tpu.memory_space<vmem>>, vector<8x56xbf16>
    %c0_1 = arith.constant 0 : index
    %c0_2 = arith.constant 0 : index
    %1 = vector.load %arg2[%c0_1, %c0_2] : memref<56x24xbf16, #tpu.memory_space<vmem>>, vector<56x24xbf16>
    %cst = arith.constant dense<0.000000e+00> : vector<8x24xf32>
    %2 = tpu.matmul %0, %1, %cst {dimension_numbers = #tpu.dot_dimension_numbers<[1], [0], [0], [1], [0, 0, 1, 1], [], []>} : vector<8x56xbf16>, vector<56x24xbf16>, vector<8x24xf32> -> vector<8x24xf32>
    %c0_3 = arith.constant 0 : index
    %c0_4 = arith.constant 0 : index
    %3 = vector.load %arg3[%c0_3, %c0_4] : memref<1x24xf32, #tpu.memory_space<vmem>>, vector<1x24xf32>
    %4 = vector.broadcast %3 : vector<1x24xf32> to vector<8x24xf32>
    %5 = arith.addf %2, %4 : vector<8x24xf32>
    %cst_5 = arith.constant 0.000000e+00 : f32
    %6 = vector.broadcast %cst_5 : f32 to vector<8x24xf32>
    %7 = arith.maximumf %5, %6 : vector<8x24xf32>
    %8 = arith.truncf %7 : vector<8x24xf32> to vector<8x24xbf16>
    %c0_6 = arith.constant 0 : index
    %c0_7 = arith.constant 0 : index
    %9 = vector.load %arg4[%c0_6, %c0_7] : memref<24x12xbf16, #tpu.memory_space<vmem>>, vector<24x12xbf16>
    %cst_8 = arith.constant dense<0.000000e+00> : vector<8x12xf32>
    %10 = tpu.matmul %8, %9, %cst_8 {dimension_numbers = #tpu.dot_dimension_numbers<[1], [0], [0], [1], [0, 0, 1, 1], [], []>} : vector<8x24xbf16>, vector<24x12xbf16>, vector<8x12xf32> -> vector<8x12xf32>
    %c0_9 = arith.constant 0 : index
    %c0_10 = arith.constant 0 : index
    %11 = vector.load %arg5[%c0_9, %c0_10] : memref<1x12xf32, #tpu.memory_space<vmem>>, vector<1x12xf32>
    %12 = vector.broadcast %11 : vector<1x12xf32> to vector<8x12xf32>
    %13 = arith.addf %10, %12 : vector<8x12xf32>
    %cst_11 = arith.constant 0.000000e+00 : f32
    %14 = vector.broadcast %cst_11 : f32 to vector<8x12xf32>
    %15 = arith.maximumf %13, %14 : vector<8x12xf32>
    %16 = arith.truncf %15 : vector<8x12xf32> to vector<8x12xbf16>
    %c0_12 = arith.constant 0 : index
    %c0_13 = arith.constant 0 : index
    %17 = vector.load %arg6[%c0_12, %c0_13] : memref<12x6xbf16, #tpu.memory_space<vmem>>, vector<12x6xbf16>
    %cst_14 = arith.constant dense<0.000000e+00> : vector<8x6xf32>
    %18 = tpu.matmul %16, %17, %cst_14 {dimension_numbers = #tpu.dot_dimension_numbers<[1], [0], [0], [1], [0, 0, 1, 1], [], []>} : vector<8x12xbf16>, vector<12x6xbf16>, vector<8x6xf32> -> vector<8x6xf32>
    %c0_15 = arith.constant 0 : index
    %c0_16 = arith.constant 0 : index
    %19 = vector.load %arg7[%c0_15, %c0_16] : memref<1x6xf32, #tpu.memory_space<vmem>>, vector<1x6xf32>
    %20 = vector.broadcast %19 : vector<1x6xf32> to vector<8x6xf32>
    %21 = arith.addf %18, %20 : vector<8x6xf32>
    %22 = arith.negf %21 : vector<8x6xf32>
    %23 = math.exp %22 : vector<8x6xf32>
    %cst_17 = arith.constant 1.000000e+00 : f32
    %24 = vector.broadcast %cst_17 : f32 to vector<8x6xf32>
    %25 = arith.addf %24, %23 : vector<8x6xf32>
    %26 = arith.divf %24, %25 : vector<8x6xf32>
    %c0_18 = arith.constant 0 : index
    %c0_19 = arith.constant 0 : index
    %27 = vector.load %arg8[%c0_18, %c0_19] : memref<8x6xf32, #tpu.memory_space<vmem>>, vector<8x6xf32>
    tpu.vector_store %arg8[%c0_18, %c0_19], %26 {strides = array<i32>} : memref<8x6xf32, #tpu.memory_space<vmem>>, vector<8x6xf32>,
    return
  }
  func.func @transform_0(%arg0: i32) -> (i32, i32) {
    %c0_i32 = arith.constant 0 : i32
    %c0_i32_0 = arith.constant 0 : i32
    return %arg0, %c0_i32 : i32, i32
  }
  func.func @transform_1(%arg0: i32) -> (i32, i32) {
    %c0_i32 = arith.constant 0 : i32
    %c0_i32_0 = arith.constant 0 : i32
    %c0_i32_1 = arith.constant 0 : i32
    return %c0_i32, %c0_i32_0 : i32, i32
  }
  func.func @transform_2(%arg0: i32) -> (i32, i32) {
    %c0_i32 = arith.constant 0 : i32
    %c0_i32_0 = arith.constant 0 : i32
    %c0_i32_1 = arith.constant 0 : i32
    return %c0_i32, %c0_i32_0 : i32, i32
  }
  func.func @transform_3(%arg0: i32) -> (i32, i32) {
    %c0_i32 = arith.constant 0 : i32
    %c0_i32_0 = arith.constant 0 : i32
    %c0_i32_1 = arith.constant 0 : i32
    return %c0_i32, %c0_i32_0 : i32, i32
  }
  func.func @transform_4(%arg0: i32) -> (i32, i32) {
    %c0_i32 = arith.constant 0 : i32
    %c0_i32_0 = arith.constant 0 : i32
    %c0_i32_1 = arith.constant 0 : i32
    return %c0_i32, %c0_i32_0 : i32, i32
  }
  func.func @transform_5(%arg0: i32) -> (i32, i32) {
    %c0_i32 = arith.constant 0 : i32
    %c0_i32_0 = arith.constant 0 : i32
    %c0_i32_1 = arith.constant 0 : i32
    return %c0_i32, %c0_i32_0 : i32, i32
  }
  func.func @transform_6(%arg0: i32) -> (i32, i32) {
    %c0_i32 = arith.constant 0 : i32
    %c0_i32_0 = arith.constant 0 : i32
    %c0_i32_1 = arith.constant 0 : i32
    return %c0_i32, %c0_i32_0 : i32, i32
  }
  func.func @transform_7(%arg0: i32) -> (i32, i32) {
    %c0_i32 = arith.constant 0 : i32
    %c0_i32_0 = arith.constant 0 : i32
    return %arg0, %c0_i32 : i32, i32
  }
}

</mosaic_0001>

<llo_original>
// kernel: net_forward.1
$region0: #{net_forward.1}
  #allocation0 [shape = 'u32[]', space=smem, size = 0x4, offset = 0x4, fixed_abs, tag = 'smem constant byte address 0x4 - core index']
  #allocation1 [shape = 'u32[72,128]{1,0:T(1,128)}', space=vmem, size = 0x9000, scoped, tag = 'internal scratch']
  %s0 = inlined_call_operand.vmem [shape: bf16[8,56], index: 0, kind: input, shape index: {}]
  %s1 = inlined_call_operand.vmem [shape: bf16[56,24], index: 1, kind: input, shape index: {}]
  %s2 = inlined_call_operand.vmem [shape: f32[1,24], index: 2, kind: input, shape index: {}]
  %s3 = inlined_call_operand.vmem [shape: bf16[24,12], index: 3, kind: input, shape index: {}]
  %s4 = inlined_call_operand.vmem [shape: f32[1,12], index: 4, kind: input, shape index: {}]
  %s5 = inlined_call_operand.vmem [shape: bf16[12,6], index: 5, kind: input, shape index: {}]
  %s6 = inlined_call_operand.vmem [shape: f32[1,6], index: 6, kind: input, shape index: {}]
  %s7 = inlined_call_operand.hbm [shape: f32[8,6], index: 7, kind: output, shape index: {}]
  %s8 = sld [smem:[#allocation0]]
  $region38: #{net_forward.1} parent=0
    _
  %s10 = ssub.s32 1, %s8
  %s11 = scalar_select 0, %s10, %s8
  $region1: #{net_forward.1} parent=0
    #allocation2 [shape = 'u8[4096]{0}', space=vmem, size = 0x1000, scoped, tag = 'output window, operand 0, single buffered']
    #allocation3 [shape = 's32[1]{0}', space=sflag, size = 0x4, scoped, tag = 'scoped memory for net_forward.1']
    %12 = vsyncpa [#allocation3], 0
    // Predicated region
    $region2: #{net_forward.1} parent=1 // pred_check
      _
    $region3: #{net_forward.1} parent=1 // pred_check_branch
      %14 = sbr.rel (0) target = $region5
    $region4: #{net_forward.1} parent=1 // pred_region
      _
    $region5: #{net_forward.1} parent=1 // pred_fallthru
      _
    // Predicated region
    $region6: #{net_forward.1} parent=1 // pred_check
      _
    $region7: #{net_forward.1} parent=1 // pred_check_branch
      %16 = sbr.rel (0) target = $region9
    $region8: #{net_forward.1} parent=1 // pred_region
      _
    $region9: #{net_forward.1} parent=1 // pred_fallthru
      _
    // Predicated region
    $region10: #{net_forward.1} parent=1 // pred_check
      _
    $region11: #{net_forward.1} parent=1 // pred_check_branch
      %18 = sbr.rel (0) target = $region13
    $region12: #{net_forward.1} parent=1 // pred_region
      _
    $region13: #{net_forward.1} parent=1 // pred_fallthru
      _
    // Predicated region
    $region14: #{net_forward.1} parent=1 // pred_check
      _
    $region15: #{net_forward.1} parent=1 // pred_check_branch
      %20 = sbr.rel (0) target = $region17
    $region16: #{net_forward.1} parent=1 // pred_region
      _
    $region17: #{net_forward.1} parent=1 // pred_fallthru
      _
    // Predicated region
    $region18: #{net_forward.1} parent=1 // pred_check
      _
    $region19: #{net_forward.1} parent=1 // pred_check_branch
      %22 = sbr.rel (0) target = $region21
    $region20: #{net_forward.1} parent=1 // pred_region
      _
    $region21: #{net_forward.1} parent=1 // pred_fallthru
      _
    // Predicated region
    $region22: #{net_forward.1} parent=1 // pred_check
      _
    $region23: #{net_forward.1} parent=1 // pred_check_branch
      %24 = sbr.rel (0) target = $region25
    $region24: #{net_forward.1} parent=1 // pred_region
      _
    $region25: #{net_forward.1} parent=1 // pred_fallthru
      _
    // Predicated region
    $region26: #{net_forward.1} parent=1 // pred_check
      _
    $region27: #{net_forward.1} parent=1 // pred_check_branch
      %26 = sbr.rel (0) target = $region29
    $region28: #{net_forward.1} parent=1 // pred_region
      _
    $region29: #{net_forward.1} parent=1 // pred_fallthru
      _
    %v28 = vld [vmem:[%s0] sm:$0xf]
    %v29 = vld [vmem:[%s1] sm:$0xf]
    %v30 = vld [vmem:[%s1 + $0x4] sm:$0xf]
    %v31 = vld [vmem:[%s1 + $0x8] sm:$0xf]
    %v32 = vld [vmem:[%s1 + $0xc] sm:$0xf]
    %v33 = vld [vmem:[%s1 + $0x10] sm:$0xf]
    %v34 = vld [vmem:[%s1 + $0x14] sm:$0xf]
    %v35 = vld [vmem:[%s1 + $0x18] sm:$0xf]
    %v36 = vld [vmem:[%s2] sm:$0x1]
    %v38 = vperm.slane %v36, 0
    %v47 = vunpack.c.l.b16 %v29
    %v48 = vunpack.c.l.b16 %v30
    %v49 = vunpack.c.l.b16 %v31
    %v50 = vunpack.c.l.b16 %v32
    %v51 = vunpack.c.l.b16 %v33
    %v52 = vunpack.c.l.b16 %v34
    %v53 = vunpack.c.l.b16 %v35
    %v54 = vpack.c.b16 %v48, %v47
    %v55 = vpack.c.b16 %v50, %v49
    %v56 = vpack.c.b16 %v52, %v51
    %v57 = vpack.c.b16 %v53, %v53
    %vm61 = vcmask 457728
    %v63 = vsel %vm61, %v28, 0
    %vm65 = vcmask 1043456
    %v67 = vsel %vm65, %v57, 0
    %69 = vmatpush.bf16.msra.mxu0 0
    %70 = vmatpush.bf16.msra.mxu0 0
    %71 = vmatpush.bf16.msra.mxu0 0
    %72 = vmatpush.bf16.msra.mxu0 0
    %73 = vmatpush.bf16.msra.mxu0 %v67
    %74 = vmatpush.bf16.msra.mxu0 %v56
    %75 = vmatpush.bf16.msra.mxu0 %v55
    %76 = vmatpush.bf16.msra.mxu0 %v54
    %77 = vmatmul.bf16.gmra.mxu0 %v63
    %v78 = vpop.f32.mrf.mxu0
    %v79 = vadd.f32 %v38, %v78
    %v80 = vpop.f32.mrf.mxu0
    %81 = vdwg.mxu0
    %v82 = vmax.f32 %v79, 0.0
    %v83 = vpack.c.bf16 %v82, %v82
    %v84 = vld [vmem:[%s3] sm:$0xf]
    %v85 = vld [vmem:[%s3 + $0x4] sm:$0xf]
    %v86 = vld [vmem:[%s3 + $0x8] sm:$0xf]
    %v87 = vld [vmem:[%s4] sm:$0x1]
    %v89 = vperm.slane %v87, 0
    %v94 = vunpack.c.l.b16 %v84
    %v95 = vunpack.c.l.b16 %v85
    %v96 = vunpack.c.l.b16 %v86
    %v97 = vpack.c.b16 %v95, %v94
    %v98 = vpack.c.b16 %v96, %v96
    %vm100 = vcmask 195584
    %v102 = vsel %vm100, %v83, 0
    %v105 = vsel %vm65, %v98, 0
    %107 = vmatpush.bf16.msra.mxu0 0
    %108 = vmatpush.bf16.msra.mxu0 0
    %109 = vmatpush.bf16.msra.mxu0 0
    %110 = vmatpush.bf16.msra.mxu0 0
    %111 = vmatpush.bf16.msra.mxu0 0
    %112 = vmatpush.bf16.msra.mxu0 0
    %113 = vmatpush.bf16.msra.mxu0 %v105
    %114 = vmatpush.bf16.msra.mxu0 %v97
    %115 = vmatmul.bf16.gmra.mxu0 %v102
    %v116 = vpop.f32.mrf.mxu0
    %v117 = vadd.f32 %v89, %v116
    %v118 = vpop.f32.mrf.mxu0
    %119 = vdwg.mxu0
    %v120 = vmax.f32 %v117, 0.0
    %v121 = vpack.c.bf16 %v120, %v120
    %v122 = vld [vmem:[%s5] sm:$0xf]
    %v123 = vld [vmem:[%s5 + $0x4] sm:$0x3]
    %v124 = vld [vmem:[%s6] sm:$0x1]
    %v126 = vperm.slane %v124, 0
    %v130 = vunpack.c.l.b16 %v122
    %v131 = vunpack.c.l.b16 %v123
    %v132 = vpack.c.b16 %v131, %v130
    %vm133 = vcmask 97280
    %v135 = vsel %vm133, %v121, 0
    %vm137 = vcmask 1045504
    %v139 = vsel %vm137, %v132, 0
    %141 = vmatpush.bf16.msra.mxu0 0
    %142 = vmatpush.bf16.msra.mxu0 0
    %143 = vmatpush.bf16.msra.mxu0 0
    %144 = vmatpush.bf16.msra.mxu0 0
    %145 = vmatpush.bf16.msra.mxu0 0
    %146 = vmatpush.bf16.msra.mxu0 0
    %147 = vmatpush.bf16.msra.mxu0 0
    %148 = vmatpush.bf16.msra.mxu0 %v139
    %149 = vmatmul.bf16.gmra.mxu0 %v135
    %v150 = vpop.f32.mrf.mxu0
    %v151 = vadd.f32 %v126, %v150
    %v152 = vpop.f32.mrf.mxu0
    %153 = vdwg.mxu0
    %v154 = vxor.u32 %v151, 2147483648
    %v155 = vmul.f32 %v154, 1.442695
    %v156 = vpow.pop %v155
    %v157 = vadd.f32 %v156, 1.0
    %v158 = vrcp.pop %v157
    %v159 = vmul.f32 %v157, %v158
    %v160 = vsub.f32 1.0, %v159
    %v161 = vmul.f32 %v158, %v160
    %v162 = vadd.f32 %v158, %v161
    %vm163 = vweird.f32 %v157
    %vm164 = vweird.f32 %v158
    %vm165 = vmor %vm163, %vm164
    %v166 = vsel %vm165, %v158, %v162
    %v167 = vand.u32 2147483647, %v157
    %vm168 = vcmp.eq.f32.partialorder %v167, 8.507059e+37
    %v169 = vand.u32 %v157, 2147483648
    %v170 = vor.u32 1.1754944e-38, %v169
    %v171 = vsel %vm168, %v170, %v166
    %v172 = vmul.f32 1.0, %v171
    %vm173 = vcmask 48128
    %174 = vst.msk [vmem:[#allocation2] sm:$0xff] %vm173, %v172
    // Predicated region
    $region30: #{net_forward.1} parent=1 // pred_check
      _
    $region31: #{net_forward.1} parent=1 // pred_check_branch
      %176 = sbr.rel (0) target = $region33
    $region32: #{net_forward.1} parent=1 // pred_region
      %178 = vsyncadd [#allocation3], 0
      %s180 = sshll.u32 [#allocation2], 4
      %s181 = int_to_ptr.vmem [resolvable:$true] %s180
      %s182 = sshll.u32 %s7, 4
      %s183 = int_to_ptr.hbm [resolvable:$true] %s182
      %185 = dma.vmem_to_hbm [thread:$0]  %s181, 128, %s183, [#allocation3]
    $region33: #{net_forward.1} parent=1 // pred_fallthru
      _
    // Predicated region
    $region34: #{net_forward.1} parent=1 // pred_check
      _
    $region35: #{net_forward.1} parent=1 // pred_check_branch
      %187 = sbr.rel (0) target = $region37
    $region36: #{net_forward.1} parent=1 // pred_region
      %189 = dma.done [#allocation3], 128
    $region37: #{net_forward.1} parent=1 // pred_fallthru
      _
    %190 = vsyncpa [#allocation3], 1

</llo_original>
